<compile_context>
chip_gen: v5e
topology: v5e:2x2
jax: 0.10.0
libtpu: 0.0.40
codegen_flags: <defaults>
</compile_context>

<pallas_src>
import functools

import jax
import jax.numpy as jnp
from jax.experimental import pallas as pl
from jax.experimental.pallas import tpu as pltpu

_MIB = 1024 * 1024


def _round_up(x, m):
    return (x + m - 1) // m * m


def _vmem_capacity_bytes():
    try:
        return int(pltpu.get_tpu_info().vmem_capacity_bytes)
    except Exception:
        return 64 * _MIB  # conservative (v7x-sized) default


def _resident_footprint(tm, hp, x_isz, w_isz):
    # x slab (double-buffered) + W (single-buffered, resident) + bias + out.
    return (2 * tm * hp * x_isz        # x rows
            + hp * hp * w_isz          # W, Buffered(1)
            + hp * x_isz               # bias, Buffered(1)
            + 2 * tm * hp * x_isz)     # output


def _ntiled_footprint(tm, tn, hp, x_isz, w_isz):
    return (2 * tm * hp * x_isz        # x rows (reused across N tiles)
            + 2 * hp * tn * w_isz      # W column slice
            + 2 * tn * x_isz           # bias slice
            + 2 * tm * tn * x_isz)     # output tile


def _choose_plan(m, hp, x_isz, w_isz, budget, block_n=None):
    """Returns (mode, tm, tn). mode is 'resident' (tn == hp) or 'ntiled'."""
    tm = min(512, _round_up(m, 8))
    if m >= 512:
        # Guarantee >= 2 M tiles so both v7x TensorCores get work.
        tm = min(tm, _round_up(-(-m // 2), 8))

    if block_n is None:
        for t in (tm,
                  _round_up(max(64, tm // 2), 8),
                  _round_up(max(64, tm // 4), 8)):
            if _resident_footprint(t, hp, x_isz, w_isz) <= budget:
                return "resident", t, hp

    # N-tiled fallback (W cannot stay VMEM-resident, or explicitly forced).
    if block_n is not None:
        assert block_n % 128 == 0
        tn = min(block_n, hp)
    else:
        tn = 128
        for cand in (1024, 512, 256, 128):
            if cand <= hp and _ntiled_footprint(tm, cand, hp, x_isz, w_isz) <= budget:
                tn = cand
                break
    while tm > 64 and _ntiled_footprint(tm, tn, hp, x_isz, w_isz) > budget:
        tm = _round_up(tm // 2, 8)
    return "ntiled", tm, tn


def _resident_kernel(x_ref, w_ref, b_ref, o_ref, *, compute_dtype):
    # x_ref: (TM, Hp), w_ref: (Hp, Hp) resident, b_ref: (1, Hp), o_ref: (TM, Hp).
    # Full contraction in one step -> direct write, no accumulator scratch.
    acc = jnp.dot(x_ref[...].astype(compute_dtype), w_ref[...],
                  preferred_element_type=jnp.float32)
    o_ref[...] = (acc
                  + b_ref[...].astype(jnp.float32)
                  + x_ref[...].astype(jnp.float32)   # residual reuses the same block
                  ).astype(o_ref.dtype)


def _ntiled_kernel(x_ref, w_ref, b_ref, o_ref, *, compute_dtype):
    # x_ref: (TM, Hp) full row (reused across N tiles), w_ref: (Hp, TN) slice of
    # (W + I) so the residual is already folded in, b_ref: (1, TN), o_ref: (TM, TN).
    acc = jnp.dot(x_ref[...].astype(compute_dtype), w_ref[...],
                  preferred_element_type=jnp.float32)
    o_ref[...] = (acc + b_ref[...].astype(jnp.float32)).astype(o_ref.dtype)


def residual_linear(x, w, b, *, compute_dtype=None, block_n=None,
                    vmem_budget_bytes=None):
    """Residual(Linear): returns x @ w + b + x for x of shape (B, S, H)."""
    B, S, H = x.shape
    assert w.shape == (H, H) and b.shape == (H,)
    M = B * S
    Hp = _round_up(H, 128)                      # lane-dense output / padded contraction

    compute_dtype = x.dtype if compute_dtype is None else jnp.dtype(compute_dtype)
    x_isz = jnp.dtype(x.dtype).itemsize
    w_isz = jnp.dtype(compute_dtype).itemsize

    cap = _vmem_capacity_bytes()
    if vmem_budget_bytes is None:
        # ~48 MiB on 64 MiB parts (v7x), ~96 MiB on 128 MiB parts (v5e/v6e).
        vmem_budget_bytes = min(3 * cap // 4, cap - 16 * _MIB)

    mode, tm, tn = _choose_plan(M, Hp, x_isz, w_isz, vmem_budget_bytes, block_n)

    # H padding (zeros) is required for correctness of the contraction; M is NOT
    # padded — the partial last M block is masked on writeback and its garbage
    # rows never reach rows < M.
    x2 = x.reshape(M, H)
    if Hp != H:
        x2 = jnp.pad(x2, ((0, 0), (0, Hp - H)))
    b2 = (jnp.pad(b, (0, Hp - H)) if Hp != H else b).reshape(1, Hp)

    if mode == "resident":
        w2 = jnp.pad(w, ((0, Hp - H), (0, Hp - H))) if Hp != H else w
        if w2.dtype != compute_dtype:
            w2 = w2.astype(compute_dtype)       # wrapper-side cast (bf16 path)
        grid = (pl.cdiv(M, tm),)
        kernel = functools.partial(_resident_kernel, compute_dtype=compute_dtype)
        in_specs = [
            pl.BlockSpec((tm, Hp), lambda i: (i, 0)),                 # x, read once
            pl.BlockSpec((Hp, Hp), lambda i: (0, 0),
                         pipeline_mode=pl.Buffered(1)),               # W resident
            pl.BlockSpec((1, Hp), lambda i: (0, 0),
                         pipeline_mode=pl.Buffered(1)),               # bias resident
        ]
        out_spec = pl.BlockSpec((tm, Hp), lambda i: (i, 0))
        dims = ("parallel",)
        footprint = _resident_footprint(tm, Hp, x_isz, w_isz)
    else:
        # Residual folded into the weights: x @ (W + I) + b == x @ W + b + x.
        # TODO(synk): with compute_dtype=bf16 the folded identity limits the
        # residual term to bf16 relative precision; keep bf16 opt-in here.
        w_eff = w + jnp.eye(H, dtype=w.dtype)
        w2 = jnp.pad(w_eff, ((0, Hp - H), (0, Hp - H))) if Hp != H else w_eff
        if w2.dtype != compute_dtype:
            w2 = w2.astype(compute_dtype)
        grid = (pl.cdiv(M, tm), pl.cdiv(Hp, tn))
        kernel = functools.partial(_ntiled_kernel, compute_dtype=compute_dtype)
        in_specs = [
            pl.BlockSpec((tm, Hp), lambda i, j: (i, 0)),   # x row slab, reused over j
            pl.BlockSpec((Hp, tn), lambda i, j: (0, j)),   # (W + I) column slice
            pl.BlockSpec((1, tn), lambda i, j: (0, j)),    # bias slice
        ]
        out_spec = pl.BlockSpec((tm, tn), lambda i, j: (i, j))
        dims = ("parallel", "parallel")
        footprint = _ntiled_footprint(tm, tn, Hp, x_isz, w_isz)

    vmem_limit = int(min(min(cap - 8 * _MIB, 110 * _MIB),
                         max(32 * _MIB, footprint + footprint // 4 + 2 * _MIB)))

    out = pl.pallas_call(
        kernel,
        out_shape=jax.ShapeDtypeStruct((M, Hp), x.dtype),
        grid_spec=pltpu.PrefetchScalarGridSpec(
            num_scalar_prefetch=0,
            grid=grid,
            in_specs=in_specs,
            out_specs=out_spec,
        ),
        compiler_params=pltpu.CompilerParams(
            dimension_semantics=dims,
            vmem_limit_bytes=vmem_limit,
        ),
    )(x2, w2, b2)

    if Hp != H:
        out = out[:, :H]
    return out.reshape(B, S, H)


if __name__ == "__main__":
    root = jax.random.PRNGKey(0)
    k1, k2, k3 = jax.random.split(root, 3)
    HIGH = jax.lax.Precision.HIGHEST

    # --- Test 1: module-spec small shapes (H=32 lane-padded to 128), resident path. ---
    kx, kw, kb = jax.random.split(k1, 3)
    B, S, H = 2, 8, 32
    x = jax.random.normal(kx, (B, S, H), dtype=jnp.float32)
    w = jax.random.normal(kw, (H, H), dtype=jnp.float32) * (1.0 / jnp.sqrt(H))
    b = jax.random.normal(kb, (H,), dtype=jnp.float32) * 0.01

    out = jax.block_until_ready(residual_linear(x, w, b))
    ref = jnp.einsum("bsh,hk->bsk", x, w, precision=HIGH) + b + x
    assert out.shape == x.shape
    assert jnp.allclose(out, ref, atol=1e-4, rtol=1e-4)

    # --- Test 2: force the N-tiled fallback (H=200 -> Hp=256, two N tiles). ---
    kx2, kw2, kb2 = jax.random.split(k2, 3)
    B2, S2, H2 = 4, 96, 200
    x2 = jax.random.normal(kx2, (B2, S2, H2), dtype=jnp.float32)
    w2 = jax.random.normal(kw2, (H2, H2), dtype=jnp.float32) * (1.0 / jnp.sqrt(H2))
    b2 = jax.random.normal(kb2, (H2,), dtype=jnp.float32) * 0.01

    out2 = jax.block_until_ready(residual_linear(x2, w2, b2, block_n=128))
    ref2 = jnp.einsum("bsh,hk->bsk", x2, w2, precision=HIGH) + b2 + x2
    assert out2.shape == x2.shape
    assert jnp.allclose(out2, ref2, atol=1e-3, rtol=1e-3)

    # --- Test 3: multi-M-tile resident path with a partial (masked) last M block. ---
    kx3, kw3, kb3 = jax.random.split(k3, 3)
    B3, S3, H3 = 8, 130, 128                    # M=1040 -> tm=512 -> 3 tiles, last partial
    x3 = jax.random.normal(kx3, (B3, S3, H3), dtype=jnp.float32)
    w3 = jax.random.normal(kw3, (H3, H3), dtype=jnp.float32) * (1.0 / jnp.sqrt(H3))
    b3 = jax.random.normal(kb3, (H3,), dtype=jnp.float32) * 0.01

    out3 = jax.block_until_ready(residual_linear(x3, w3, b3))
    ref3 = jnp.einsum("bsh,hk->bsk", x3, w3, precision=HIGH) + b3 + x3
    assert out3.shape == x3.shape
    assert jnp.allclose(out3, ref3, atol=1e-3, rtol=1e-3)

    print("KERNEL_OK")
</pallas_src>

<mosaic_0001>
module attributes {stable_mosaic.version = 11 : i64} {
  func.func @_resident_kernel(%arg0: i32, %arg1: memref<16x128xf32, #tpu.memory_space<vmem>>, %arg2: memref<128x128xf32, #tpu.memory_space<vmem>>, %arg3: memref<1x128xf32, #tpu.memory_space<vmem>>, %arg4: memref<16x128xf32, #tpu.memory_space<vmem>>) attributes {dimension_semantics = [#tpu.dimension_semantics<parallel>], iteration_bounds = array<i64: 1>, scalar_prefetch = 0 : i64, scratch_operands = 0 : i64, tpu.core_type = #tpu.core_type<tc>, window_params = [{transform_indices = @transform_0, window_bounds = array<i64: 16, 128>}, {pipeline_mode = #tpu.pipeline_mode<synchronous>, transform_indices = @transform_1, window_bounds = array<i64: 128, 128>}, {pipeline_mode = #tpu.pipeline_mode<synchronous>, transform_indices = @transform_2, window_bounds = array<i64: 1, 128>}, {transform_indices = @transform_3, window_bounds = array<i64: 16, 128>}]} {
    %c0 = arith.constant 0 : index
    %c0_0 = arith.constant 0 : index
    %0 = vector.load %arg1[%c0, %c0_0] : memref<16x128xf32, #tpu.memory_space<vmem>>, vector<16x128xf32>
    %c0_1 = arith.constant 0 : index
    %c0_2 = arith.constant 0 : index
    %1 = vector.load %arg2[%c0_1, %c0_2] : memref<128x128xf32, #tpu.memory_space<vmem>>, vector<128x128xf32>
    %cst = arith.constant dense<0.000000e+00> : vector<16x128xf32>
    %2 = tpu.matmul %0, %1, %cst {dimension_numbers = #tpu.dot_dimension_numbers<[1], [0], [0], [1], [0, 0, 1, 1], [], []>} : vector<16x128xf32>, vector<128x128xf32>, vector<16x128xf32> -> vector<16x128xf32>
    %c0_3 = arith.constant 0 : index
    %c0_4 = arith.constant 0 : index
    %3 = vector.load %arg3[%c0_3, %c0_4] : memref<1x128xf32, #tpu.memory_space<vmem>>, vector<1x128xf32>
    %4 = vector.broadcast %3 : vector<1x128xf32> to vector<16x128xf32>
    %5 = arith.addf %2, %4 : vector<16x128xf32>
    %c0_5 = arith.constant 0 : index
    %c0_6 = arith.constant 0 : index
    %6 = vector.load %arg1[%c0_5, %c0_6] : memref<16x128xf32, #tpu.memory_space<vmem>>, vector<16x128xf32>
    %7 = arith.addf %5, %6 : vector<16x128xf32>
    %c0_7 = arith.constant 0 : index
    %c0_8 = arith.constant 0 : index
    %8 = vector.load %arg4[%c0_7, %c0_8] : memref<16x128xf32, #tpu.memory_space<vmem>>, vector<16x128xf32>
    tpu.vector_store %arg4[%c0_7, %c0_8], %7 {strides = array<i32>} : memref<16x128xf32, #tpu.memory_space<vmem>>, vector<16x128xf32>,
    return
  }
  func.func @transform_0(%arg0: i32) -> (i32, i32) {
    %c0_i32 = arith.constant 0 : i32
    %c0_i32_0 = arith.constant 0 : i32
    return %arg0, %c0_i32 : i32, i32
  }
  func.func @transform_1(%arg0: i32) -> (i32, i32) {
    %c0_i32 = arith.constant 0 : i32
    %c0_i32_0 = arith.constant 0 : i32
    %c0_i32_1 = arith.constant 0 : i32
    return %c0_i32, %c0_i32_0 : i32, i32
  }
  func.func @transform_2(%arg0: i32) -> (i32, i32) {
    %c0_i32 = arith.constant 0 : i32
    %c0_i32_0 = arith.constant 0 : i32
    %c0_i32_1 = arith.constant 0 : i32
    return %c0_i32, %c0_i32_0 : i32, i32
  }
  func.func @transform_3(%arg0: i32) -> (i32, i32) {
    %c0_i32 = arith.constant 0 : i32
    %c0_i32_0 = arith.constant 0 : i32
    return %arg0, %c0_i32 : i32, i32
  }
}

</mosaic_0001>

<llo_original>
// kernel: tpu_custom_call.1
$region0: #{tpu_custom_call.1}
  #allocation0 [shape = 'u32[]', space=smem, size = 0x4, offset = 0x4, fixed_abs, tag = 'smem constant byte address 0x4 - core index']
  #allocation1 [shape = 'u32[72,128]{1,0:T(1,128)}', space=vmem, size = 0x9000, scoped, tag = 'internal scratch']
  %s0 = inlined_call_operand.hbm [shape: f32[16,128], index: 0, kind: input, shape index: {}]
  %s1 = inlined_call_operand.hbm [shape: f32[128,128], index: 1, kind: input, shape index: {}]
  %s2 = inlined_call_operand.vmem [shape: f32[1,128], index: 2, kind: input, shape index: {}]
  %s3 = inlined_call_operand.hbm [shape: f32[16,128], index: 3, kind: output, shape index: {}]
  %s4 = sld [smem:[#allocation0]]
  $region30: #{tpu_custom_call.1} parent=0
    _
  %s6 = ssub.s32 1, %s4
  %s7 = scalar_select 0, %s6, %s4
  $region1: #{tpu_custom_call.1} parent=0
    #allocation2 [shape = 'u8[8192]{0}', space=vmem, size = 0x2000, scoped, tag = 'input window, operand 0, single buffered']
    #allocation3 [shape = 's32[1]{0}', space=sflag, size = 0x4, scoped, tag = 'scoped memory for tpu_custom_call.1']
    #allocation4 [shape = 's32[1]{0}', space=sflag, size = 0x4, scoped, tag = 'scoped memory for tpu_custom_call.1']
    #allocation5 [shape = 'u8[65536]{0}', space=vmem, size = 0x10000, scoped, tag = 'input window, operand 1, single buffered']
    #allocation6 [shape = 's32[1]{0}', space=sflag, size = 0x4, scoped, tag = 'scoped memory for tpu_custom_call.1']
    #allocation7 [shape = 'u8[8192]{0}', space=vmem, size = 0x2000, scoped, tag = 'output window, operand 0, single buffered']
    %8 = vsyncpa [#allocation3], 0
    %9 = vsyncpa [#allocation6], 0
    %10 = vsyncpa [#allocation4], 0
    // Predicated region
    $region2: #{tpu_custom_call.1} parent=1 // pred_check
      _
    $region3: #{tpu_custom_call.1} parent=1 // pred_check_branch
      %12 = sbr.rel (0) target = $region5
    $region4: #{tpu_custom_call.1} parent=1 // pred_region
      %14 = vsyncadd [#allocation3], 0
      %s15 = sshll.u32 %s0, 4
      %s16 = int_to_ptr.hbm [resolvable:$true] %s15
      %s17 = sshll.u32 [#allocation2], 4
      %s18 = int_to_ptr.vmem [resolvable:$true] %s17
      %23 = dma.hbm_to_vmem [thread:$0]  %s16, 256, %s18, [#allocation3], 128, 128, 8
    $region5: #{tpu_custom_call.1} parent=1 // pred_fallthru
      _
    // Predicated region
    $region6: #{tpu_custom_call.1} parent=1 // pred_check
      _
    $region7: #{tpu_custom_call.1} parent=1 // pred_check_branch
      %25 = sbr.rel (0) target = $region9
    $region8: #{tpu_custom_call.1} parent=1 // pred_region
      %27 = vsyncadd [#allocation6], 0
      %s28 = sshll.u32 %s1, 4
      %s29 = int_to_ptr.hbm [resolvable:$true] %s28
      %s30 = sshll.u32 [#allocation5], 4
      %s31 = int_to_ptr.vmem [resolvable:$true] %s30
      %36 = dma.hbm_to_vmem [thread:$0]  %s29, 2048, %s31, [#allocation6], 128, 128, 8
    $region9: #{tpu_custom_call.1} parent=1 // pred_fallthru
      _
    // Predicated region
    $region10: #{tpu_custom_call.1} parent=1 // pred_check
      _
    $region11: #{tpu_custom_call.1} parent=1 // pred_check_branch
      %38 = sbr.rel (0) target = $region13
    $region12: #{tpu_custom_call.1} parent=1 // pred_region
      _
    $region13: #{tpu_custom_call.1} parent=1 // pred_fallthru
      _
    // Predicated region
    $region14: #{tpu_custom_call.1} parent=1 // pred_check
      _
    $region15: #{tpu_custom_call.1} parent=1 // pred_check_branch
      %40 = sbr.rel (0) target = $region17
    $region16: #{tpu_custom_call.1} parent=1 // pred_region
      %42 = dma.done [#allocation3], 256
    $region17: #{tpu_custom_call.1} parent=1 // pred_fallthru
      _
    // Predicated region
    $region18: #{tpu_custom_call.1} parent=1 // pred_check
      _
    $region19: #{tpu_custom_call.1} parent=1 // pred_check_branch
      %44 = sbr.rel (0) target = $region21
    $region20: #{tpu_custom_call.1} parent=1 // pred_region
      %46 = dma.done [#allocation6], 2048
    $region21: #{tpu_custom_call.1} parent=1 // pred_fallthru
      _
    %v47 = vld [vmem:[#allocation2] sm:$0xff]
    %v48 = vld [vmem:[#allocation2 + $0x8] sm:$0xff]
    %v49 = vld [vmem:[#allocation5] sm:$0xff]
    %v50 = vld [vmem:[#allocation5 + $0x8] sm:$0xff]
    %v51 = vld [vmem:[#allocation5 + $0x10] sm:$0xff]
    %v52 = vld [vmem:[#allocation5 + $0x18] sm:$0xff]
    %v53 = vld [vmem:[#allocation5 + $0x20] sm:$0xff]
    %v54 = vld [vmem:[#allocation5 + $0x28] sm:$0xff]
    %v55 = vld [vmem:[#allocation5 + $0x30] sm:$0xff]
    %v56 = vld [vmem:[#allocation5 + $0x38] sm:$0xff]
    %v57 = vld [vmem:[#allocation5 + $0x40] sm:$0xff]
    %v58 = vld [vmem:[#allocation5 + $0x48] sm:$0xff]
    %v59 = vld [vmem:[#allocation5 + $0x50] sm:$0xff]
    %v60 = vld [vmem:[#allocation5 + $0x58] sm:$0xff]
    %v61 = vld [vmem:[#allocation5 + $0x60] sm:$0xff]
    %v62 = vld [vmem:[#allocation5 + $0x68] sm:$0xff]
    %v63 = vld [vmem:[#allocation5 + $0x70] sm:$0xff]
    %v64 = vld [vmem:[#allocation5 + $0x78] sm:$0xff]
    %v65 = vld [vmem:[%s2] sm:$0x1]
    %v67 = vperm.slane %v65, 0
    %69 = vmatpush.msra.mxu0 %v64
    %70 = vmatpush.msra.mxu0 %v63
    %71 = vmatpush.msra.mxu0 %v62
    %72 = vmatpush.msra.mxu0 %v61
    %73 = vmatpush.msra.mxu0 %v60
    %74 = vmatpush.msra.mxu0 %v59
    %75 = vmatpush.msra.mxu0 %v58
    %76 = vmatpush.msra.mxu0 %v57
    %77 = vmatpush.msra.mxu0 %v56
    %78 = vmatpush.msra.mxu0 %v55
    %79 = vmatpush.msra.mxu0 %v54
    %80 = vmatpush.msra.mxu0 %v53
    %81 = vmatpush.msra.mxu0 %v52
    %82 = vmatpush.msra.mxu0 %v51
    %83 = vmatpush.msra.mxu0 %v50
    %84 = vmatpush.msra.mxu0 %v49
    %85 = vmatmul.f32.gmra.mxu0 %v47
    %v86 = vpop.f32.mrf.mxu0
    %v87 = vadd.f32 %v67, %v86
    %88 = vmatmul.f32.gmra.mxu0 %v48
    %v89 = vpop.f32.mrf.mxu0
    %v90 = vadd.f32 %v67, %v89
    %91 = vdwg.mxu0
    %v92 = vadd.f32 %v87, %v47
    %v93 = vadd.f32 %v90, %v48
    %94 = vst [vmem:[#allocation7] sm:$0xff] %v92
    %95 = vst [vmem:[#allocation7 + $0x8] sm:$0xff] %v93
    // Predicated region
    $region22: #{tpu_custom_call.1} parent=1 // pred_check
      _
    $region23: #{tpu_custom_call.1} parent=1 // pred_check_branch
      %97 = sbr.rel (0) target = $region25
    $region24: #{tpu_custom_call.1} parent=1 // pred_region
      %99 = vsyncadd [#allocation4], 0
      %s100 = sshll.u32 [#allocation7], 4
      %s101 = int_to_ptr.vmem [resolvable:$true] %s100
      %s102 = sshll.u32 %s3, 4
      %s103 = int_to_ptr.hbm [resolvable:$true] %s102
      %108 = dma.vmem_to_hbm [thread:$0]  %s101, 256, %s103, [#allocation4], 128, 128, 8
    $region25: #{tpu_custom_call.1} parent=1 // pred_fallthru
      _
    // Predicated region
    $region26: #{tpu_custom_call.1} parent=1 // pred_check
      _
    $region27: #{tpu_custom_call.1} parent=1 // pred_check_branch
      %110 = sbr.rel (0) target = $region29
    $region28: #{tpu_custom_call.1} parent=1 // pred_region
      %112 = dma.done [#allocation4], 256
    $region29: #{tpu_custom_call.1} parent=1 // pred_fallthru
      _
    %113 = vsyncpa [#allocation3], 1
    %114 = vsyncpa [#allocation6], 1
    %115 = vsyncpa [#allocation4], 1

</llo_original>
